<compile_context>
chip_gen: v6e
topology: v6e:2x2x1
jax: 0.10.0
libtpu: 0.0.40
codegen_flags: <defaults>
</compile_context>

<pallas_src>
import functools

import numpy as np

import jax
import jax.numpy as jnp
from jax import lax
from jax.experimental import pallas as pl
from jax.experimental.pallas import tpu as pltpu

LANES = 128
TARGET_ROWS_PER_BLOCK = 8192          # (8192,128) f32 = 4 MiB per input block
_MIN_ROWS_TO_SPLIT = 256              # don't core-split tiny inputs
_VMEM_LIMIT_BYTES = 28 * 1024 * 1024  # 2 inputs x 4 MiB x 2 buffers = 16 MiB + slack


def _round_up(x, m):
    return ((x + m - 1) // m) * m


def _sublane_multiple(dtype):
    # Packed sublane tile height: f32 -> 8, bf16/f16 -> 16, int8/fp8 -> 32.
    return {4: 8, 2: 16, 1: 32}.get(np.dtype(dtype).itemsize, 8)


def _num_tensorcores():
    """TensorCores one Pallas kernel can shard a 'parallel' axis across."""
    kind = ""
    try:
        kind = jax.devices()[0].device_kind.lower()
    except Exception:
        pass
    # v7x: 2 TCs per chip; v5e/v6e (and emulation): 1 -- a 2-way split there
    # would just re-stream the input and double the reduction tail.
    return 2 if "v7" in kind else 1


def _silog_partial_kernel(est_ref, gt_ref, acc_d_ref, acc_d2_ref, *,
                          tm: int, rows: int, steps: int, needs_mask: bool):
    c = pl.program_id(0)          # TensorCore / parallel axis
    j = pl.program_id(1)          # sequential streaming (reduction) axis

    @pl.when(j == 0)
    def _():
        acc_d_ref[...] = jnp.zeros_like(acc_d_ref)
        acc_d2_ref[...] = jnp.zeros_like(acc_d2_ref)

    est = est_ref[...].astype(jnp.float32)
    gt = gt_ref[...].astype(jnp.float32)

    def accumulate(e, g):
        # TODO(synk): if a v7x profile shows the EUP slot co-binding, switch to
        # jnp.log(e / g) to halve the log pushes (shifts rounding by ~1 ulp).
        d = jnp.log(e) - jnp.log(g)
        # Reduce the (tm,128) block to a single (8,128) vreg with pure VPU adds
        # (each (8,128) f32 slice is exactly one vreg), then add into the tiny
        # resident accumulator: ~2 vld / input vreg-pair in the hot loop and a
        # negligible end-of-grid reduction.
        acc_d_ref[...] += jnp.sum(d.reshape(tm // 8, 8, LANES), axis=0)
        acc_d2_ref[...] += jnp.sum((d * d).reshape(tm // 8, 8, LANES), axis=0)

    if needs_mask:
        block_b = c * steps + j                    # intended (unclamped) block
        is_boundary = (block_b + 1) * tm > rows    # partial or clamped block

        @pl.when(jnp.logical_not(is_boundary))
        def _():
            accumulate(est, gt)                    # unmasked fast path

        @pl.when(is_boundary)
        def _():
            # Rows beyond `rows` (partial last block / fully clamped duplicate
            # block) are replaced with 1.0 BEFORE the logs, so they contribute
            # exactly 0 and can never inject NaN/Inf.
            row_ids = block_b * tm + lax.broadcasted_iota(jnp.int32, est.shape, 0)
            valid = row_ids < rows
            accumulate(jnp.where(valid, est, 1.0), jnp.where(valid, gt, 1.0))
    else:
        accumulate(est, gt)


def silog_loss(depth_est, depth_gt, variance_focus: float = 0.85):
    assert depth_est.shape == depth_gt.shape
    n = int(depth_est.size)
    if n == 0:
        return jnp.float32(jnp.nan)

    est_flat = depth_est.reshape(-1)
    gt_flat = depth_gt.reshape(-1)

    sublane = max(_sublane_multiple(depth_est.dtype),
                  _sublane_multiple(depth_gt.dtype))

    rows = max(pl.cdiv(n, LANES), sublane)
    n_pad = rows * LANES
    if n_pad != n:
        # Fold the <128-element lane tail (and tiny-input row tail) into the
        # slab by padding with 1.0: log(1)-log(1)=0, so the pad contributes
        # nothing to either sum and needs no masking.  Lane-aligned inputs
        # (numel % 128 == 0) take the zero-copy reshape path instead.
        # TODO(synk): a fully copy-free ragged path would need manual DMA from
        # a 1-D HBM ref; not worth it at these sizes.
        pad = n_pad - n
        est_flat = jnp.pad(est_flat, (0, pad), constant_values=1.0)
        gt_flat = jnp.pad(gt_flat, (0, pad), constant_values=1.0)
    est2d = est_flat.reshape(rows, LANES)
    gt2d = gt_flat.reshape(rows, LANES)

    num_cores = _num_tensorcores()
    cores = num_cores if rows >= _MIN_ROWS_TO_SPLIT * num_cores else 1
    per_core = pl.cdiv(rows, cores)
    tm = min(TARGET_ROWS_PER_BLOCK,
             _round_up(per_core, sublane),
             (rows // sublane) * sublane)       # keep every block start in-bounds
    nb = pl.cdiv(rows, tm)                      # real row-blocks
    steps = pl.cdiv(nb, cores)                  # sequential row-blocks per core
    needs_mask = (cores * steps * tm != rows)

    if cores * steps > nb:
        def in_map(c, j):
            # Clamp so no block index is out of range; clamped duplicate blocks
            # are fully masked inside the kernel.
            return (jnp.minimum(c * steps + j, nb - 1), 0)
    else:
        def in_map(c, j):
            return (c * steps + j, 0)

    kernel = functools.partial(_silog_partial_kernel, tm=tm, rows=rows,
                               steps=steps, needs_mask=needs_mask)

    in_bytes = (np.dtype(est2d.dtype).itemsize
                + np.dtype(gt2d.dtype).itemsize) * n_pad
    cost = pl.CostEstimate(flops=3 * n_pad, transcendentals=2 * n_pad,
                           bytes_accessed=in_bytes + 2 * cores * 8 * LANES * 4)

    # TODO(synk): on v7x, confirm in xprof that the leading "parallel" axis
    # actually lands on both TensorCores; if one TC idles, switch to
    # dimension_semantics=(pltpu.CORE_PARALLEL, pltpu.ARBITRARY).
    acc_d, acc_d2 = pl.pallas_call(
        kernel,
        out_shape=(jax.ShapeDtypeStruct((cores, 8, LANES), jnp.float32),
                   jax.ShapeDtypeStruct((cores, 8, LANES), jnp.float32)),
        grid_spec=pltpu.PrefetchScalarGridSpec(
            num_scalar_prefetch=0,
            grid=(cores, steps),
            in_specs=[pl.BlockSpec((tm, LANES), in_map),
                      pl.BlockSpec((tm, LANES), in_map)],
            out_specs=(pl.BlockSpec((None, 8, LANES), lambda c, j: (c, 0, 0)),
                       pl.BlockSpec((None, 8, LANES), lambda c, j: (c, 0, 0))),
        ),
        compiler_params=pltpu.CompilerParams(
            dimension_semantics=("parallel", "arbitrary"),
            vmem_limit_bytes=_VMEM_LIMIT_BYTES),
        cost_estimate=cost,
    )(est2d, gt2d)

    inv_n = jnp.float32(1.0 / n)     # true element count, not the padded one
    mean_d = jnp.sum(acc_d) * inv_n
    mean_d2 = jnp.sum(acc_d2) * inv_n
    # NOTE: matches the PyTorch reference exactly (no clamp of the sqrt arg,
    # no depth>0 masking, no *10 scaling — those belong to other silog variants).
    return jnp.sqrt(mean_d2 - jnp.float32(variance_focus) * mean_d * mean_d)


def _silog_loss_ref(depth_est, depth_gt, variance_focus=0.85):
    d = jnp.log(depth_est) - jnp.log(depth_gt)
    return jnp.sqrt(jnp.mean(d ** 2) - variance_focus * jnp.mean(d) ** 2)


if __name__ == "__main__":
    key = jax.random.PRNGKey(0)
    k1, k2, k3, k4, k5, k6 = jax.random.split(key, 6)

    # Test 1: lane-aligned f32 depth map (numel % 128 == 0) — zero-copy path,
    # single full block, no masking.
    de1 = jax.random.uniform(k1, (2, 32, 32), jnp.float32, minval=0.5, maxval=10.0)
    dg1 = jax.random.uniform(k2, (2, 32, 32), jnp.float32, minval=0.5, maxval=10.0)
    out1 = jax.block_until_ready(silog_loss(de1, dg1, variance_focus=0.85))
    ref1 = _silog_loss_ref(de1, dg1, variance_focus=0.85)
    assert jnp.allclose(out1, ref1, rtol=1e-5, atol=1e-5), (out1, ref1)

    # Test 2: ragged size — lane tail folded in via a tiny 1.0 pad, partial
    # last row-block handled by the masked boundary path (multi-step grid).
    de2 = jax.random.uniform(k3, (1, 37, 41), jnp.float32, minval=0.5, maxval=10.0)
    dg2 = jax.random.uniform(k4, (1, 37, 41), jnp.float32, minval=0.5, maxval=10.0)
    out2 = jax.block_until_ready(silog_loss(de2, dg2, variance_focus=0.85))
    ref2 = _silog_loss_ref(de2, dg2, variance_focus=0.85)
    assert jnp.allclose(out2, ref2, rtol=1e-5, atol=1e-5), (out2, ref2)

    # Test 3: bf16 inputs (halves HBM bytes); the kernel upcasts to f32 in VMEM.
    de3 = jax.random.uniform(k5, (4, 16, 128), jnp.float32,
                             minval=0.5, maxval=10.0).astype(jnp.bfloat16)
    dg3 = jax.random.uniform(k6, (4, 16, 128), jnp.float32,
                             minval=0.5, maxval=10.0).astype(jnp.bfloat16)
    out3 = jax.block_until_ready(silog_loss(de3, dg3, variance_focus=0.85))
    ref3 = _silog_loss_ref(de3.astype(jnp.float32), dg3.astype(jnp.float32), 0.85)
    assert jnp.allclose(out3, ref3, rtol=1e-4, atol=1e-4), (out3, ref3)

    print("KERNEL_OK")
</pallas_src>

<mosaic_0001>
module attributes {stable_mosaic.version = 11 : i64} {
  func.func @_silog_partial_kernel(%arg0: i32, %arg1: i32, %arg2: memref<16x128xf32, #tpu.memory_space<vmem>>, %arg3: memref<16x128xf32, #tpu.memory_space<vmem>>, %arg4: memref<1x8x128xf32, #tpu.memory_space<vmem>>, %arg5: memref<1x8x128xf32, #tpu.memory_space<vmem>>) attributes {dimension_semantics = [#tpu.dimension_semantics<parallel>, #tpu.dimension_semantics<arbitrary>], iteration_bounds = array<i64: 1, 1>, scalar_prefetch = 0 : i64, scratch_operands = 0 : i64, tpu.core_type = #tpu.core_type<tc>, window_params = [{transform_indices = @transform_0, window_bounds = array<i64: 16, 128>}, {transform_indices = @transform_1, window_bounds = array<i64: 16, 128>}, {transform_indices = @transform_2, window_bounds = array<i64: 1, 8, 128>}, {transform_indices = @transform_3, window_bounds = array<i64: 1, 8, 128>}]} {
    %c0_i32 = arith.constant 0 : i32
    %0 = arith.cmpi eq, %arg1, %c0_i32 : i32
    %1 = arith.extui %0 : i1 to i32
    %c0_i32_0 = arith.constant 0 : i32
    %2 = arith.cmpi ne, %1, %c0_i32_0 : i32
    scf.if %2 {
      %cst_17 = arith.constant 0.000000e+00 : f32
      %25 = vector.broadcast %cst_17 : f32 to vector<8x128xf32>
      %c0_18 = arith.constant 0 : index
      %c0_19 = arith.constant 0 : index
      %c0_20 = arith.constant 0 : index
      %26 = vector.load %arg4[%c0_18, %c0_19, %c0_20] : memref<1x8x128xf32, #tpu.memory_space<vmem>>, vector<1x8x128xf32>
      %27 = vector.shape_cast %26 : vector<1x8x128xf32> to vector<8x128xf32>
      %28 = vector.shape_cast %25 : vector<8x128xf32> to vector<1x8x128xf32>
      tpu.vector_store %arg4[%c0_18, %c0_19, %c0_20], %28 {strides = array<i32>} : memref<1x8x128xf32, #tpu.memory_space<vmem>>, vector<1x8x128xf32>,
      %cst_21 = arith.constant 0.000000e+00 : f32
      %29 = vector.broadcast %cst_21 : f32 to vector<8x128xf32>
      %c0_22 = arith.constant 0 : index
      %c0_23 = arith.constant 0 : index
      %c0_24 = arith.constant 0 : index
      %30 = vector.load %arg5[%c0_22, %c0_23, %c0_24] : memref<1x8x128xf32, #tpu.memory_space<vmem>>, vector<1x8x128xf32>
      %31 = vector.shape_cast %30 : vector<1x8x128xf32> to vector<8x128xf32>
      %32 = vector.shape_cast %29 : vector<8x128xf32> to vector<1x8x128xf32>
      tpu.vector_store %arg5[%c0_22, %c0_23, %c0_24], %32 {strides = array<i32>} : memref<1x8x128xf32, #tpu.memory_space<vmem>>, vector<1x8x128xf32>,
    } else {
    }
    %c0 = arith.constant 0 : index
    %c0_1 = arith.constant 0 : index
    %3 = vector.load %arg2[%c0, %c0_1] : memref<16x128xf32, #tpu.memory_space<vmem>>, vector<16x128xf32>
    %c0_2 = arith.constant 0 : index
    %c0_3 = arith.constant 0 : index
    %4 = vector.load %arg3[%c0_2, %c0_3] : memref<16x128xf32, #tpu.memory_space<vmem>>, vector<16x128xf32>
    %5 = math.log %3 : vector<16x128xf32>
    %6 = math.log %4 : vector<16x128xf32>
    %7 = arith.subf %5, %6 : vector<16x128xf32>
    %c0_4 = arith.constant 0 : index
    %c0_5 = arith.constant 0 : index
    %c0_6 = arith.constant 0 : index
    %8 = vector.load %arg4[%c0_4, %c0_5, %c0_6] : memref<1x8x128xf32, #tpu.memory_space<vmem>>, vector<1x8x128xf32>
    %9 = vector.shape_cast %8 : vector<1x8x128xf32> to vector<8x128xf32>
    %10 = vector.shape_cast %7 : vector<16x128xf32> to vector<2x8x128xf32>
    %cst = arith.constant dense<0.000000e+00> : vector<8x128xf32>
    %11 = vector.multi_reduction <add>, %10, %cst [0] : vector<2x8x128xf32> to vector<8x128xf32>
    %12 = arith.addf %9, %11 : vector<8x128xf32>
    %c0_7 = arith.constant 0 : index
    %c0_8 = arith.constant 0 : index
    %c0_9 = arith.constant 0 : index
    %13 = vector.load %arg4[%c0_7, %c0_8, %c0_9] : memref<1x8x128xf32, #tpu.memory_space<vmem>>, vector<1x8x128xf32>
    %14 = vector.shape_cast %13 : vector<1x8x128xf32> to vector<8x128xf32>
    %15 = vector.shape_cast %12 : vector<8x128xf32> to vector<1x8x128xf32>
    tpu.vector_store %arg4[%c0_7, %c0_8, %c0_9], %15 {strides = array<i32>} : memref<1x8x128xf32, #tpu.memory_space<vmem>>, vector<1x8x128xf32>,
    %c0_10 = arith.constant 0 : index
    %c0_11 = arith.constant 0 : index
    %c0_12 = arith.constant 0 : index
    %16 = vector.load %arg5[%c0_10, %c0_11, %c0_12] : memref<1x8x128xf32, #tpu.memory_space<vmem>>, vector<1x8x128xf32>
    %17 = vector.shape_cast %16 : vector<1x8x128xf32> to vector<8x128xf32>
    %18 = arith.mulf %7, %7 : vector<16x128xf32>
    %19 = vector.shape_cast %18 : vector<16x128xf32> to vector<2x8x128xf32>
    %cst_13 = arith.constant dense<0.000000e+00> : vector<8x128xf32>
    %20 = vector.multi_reduction <add>, %19, %cst_13 [0] : vector<2x8x128xf32> to vector<8x128xf32>
    %21 = arith.addf %17, %20 : vector<8x128xf32>
    %c0_14 = arith.constant 0 : index
    %c0_15 = arith.constant 0 : index
    %c0_16 = arith.constant 0 : index
    %22 = vector.load %arg5[%c0_14, %c0_15, %c0_16] : memref<1x8x128xf32, #tpu.memory_space<vmem>>, vector<1x8x128xf32>
    %23 = vector.shape_cast %22 : vector<1x8x128xf32> to vector<8x128xf32>
    %24 = vector.shape_cast %21 : vector<8x128xf32> to vector<1x8x128xf32>
    tpu.vector_store %arg5[%c0_14, %c0_15, %c0_16], %24 {strides = array<i32>} : memref<1x8x128xf32, #tpu.memory_space<vmem>>, vector<1x8x128xf32>,
    return
  }
  func.func @transform_0(%arg0: i32, %arg1: i32) -> (i32, i32) {
    %c1_i32 = arith.constant 1 : i32
    %0 = arith.muli %arg0, %c1_i32 : i32
    %1 = arith.addi %0, %arg1 : i32
    %c0_i32 = arith.constant 0 : i32
    %c0_i32_0 = arith.constant 0 : i32
    return %1, %c0_i32 : i32, i32
  }
  func.func @transform_1(%arg0: i32, %arg1: i32) -> (i32, i32) {
    %c1_i32 = arith.constant 1 : i32
    %0 = arith.muli %arg0, %c1_i32 : i32
    %1 = arith.addi %0, %arg1 : i32
    %c0_i32 = arith.constant 0 : i32
    %c0_i32_0 = arith.constant 0 : i32
    return %1, %c0_i32 : i32, i32
  }
  func.func @transform_2(%arg0: i32, %arg1: i32) -> (i32, i32, i32) {
    %c0_i32 = arith.constant 0 : i32
    %c0_i32_0 = arith.constant 0 : i32
    %c0_i32_1 = arith.constant 0 : i32
    return %arg0, %c0_i32, %c0_i32_0 : i32, i32, i32
  }
  func.func @transform_3(%arg0: i32, %arg1: i32) -> (i32, i32, i32) {
    %c0_i32 = arith.constant 0 : i32
    %c0_i32_0 = arith.constant 0 : i32
    %c0_i32_1 = arith.constant 0 : i32
    return %arg0, %c0_i32, %c0_i32_0 : i32, i32, i32
  }
}

</mosaic_0001>

<llo_original>
// kernel: tpu_custom_call.1
$region0: #{tpu_custom_call.1}
  #allocation0 [shape = 'u32[]', space=smem, size = 0x4, offset = 0x4, fixed_abs, tag = 'smem constant byte address 0x4 - core index']
  #allocation1 [shape = 'u32[144,128]{1,0:T(1,128)}', space=vmem, size = 0x12000, scoped, tag = 'internal scratch']
  %s0 = inlined_call_operand.hbm [shape: f32[16,128], index: 0, kind: input, shape index: {}]
  %s1 = inlined_call_operand.hbm [shape: f32[16,128], index: 1, kind: input, shape index: {}]
  %s2 = inlined_call_operand.hbm [shape: f32[1,8,128], index: 2, kind: output, shape index: {0}]
  %s3 = inlined_call_operand.hbm [shape: f32[1,8,128], index: 3, kind: output, shape index: {1}]
  %4 = xla_tuple %s2, %s3
  %s5 = sld [smem:[#allocation0]]
  $region38: #{tpu_custom_call.1} parent=0
    _
  %s7 = ssub.s32 1, %s5
  %s8 = scalar_select 0, %s7, %s5
  $region1: #{tpu_custom_call.1} parent=0
    #allocation2 [shape = 'u8[8192]{0}', space=vmem, size = 0x2000, scoped, tag = 'input window, operand 0, single buffered']
    #allocation3 [shape = 's32[1]{0}', space=sflag, size = 0x4, scoped, tag = 'scoped memory for tpu_custom_call.1']
    #allocation4 [shape = 's32[1]{0}', space=sflag, size = 0x4, scoped, tag = 'scoped memory for tpu_custom_call.1']
    #allocation5 [shape = 'u8[8192]{0}', space=vmem, size = 0x2000, scoped, tag = 'input window, operand 1, single buffered']
    #allocation6 [shape = 's32[1]{0}', space=sflag, size = 0x4, scoped, tag = 'scoped memory for tpu_custom_call.1']
    #allocation7 [shape = 'u8[4096]{0}', space=vmem, size = 0x1000, scoped, tag = 'output window, operand 0, single buffered']
    #allocation8 [shape = 'u8[4096]{0}', space=vmem, size = 0x1000, scoped, tag = 'output window, operand 1, single buffered']
    #allocation9 [shape = 's32[1]{0}', space=sflag, size = 0x4, scoped, tag = 'scoped memory for tpu_custom_call.1']
    %9 = vsyncpa [#allocation3], 0
    %10 = vsyncpa [#allocation6], 0
    %11 = vsyncpa [#allocation4], 0
    %12 = vsyncpa [#allocation9], 0
    // Predicated region
    $region2: #{tpu_custom_call.1} parent=1 // pred_check
      _
    $region3: #{tpu_custom_call.1} parent=1 // pred_check_branch
      %14 = sbr.rel (0) target = $region5
    $region4: #{tpu_custom_call.1} parent=1 // pred_region
      %s15 = sadd.s32 0, 0
      %s16 = smul.u32 2, %s15
      %s18 = ssub.s32 256, 256
      %19 = vsyncadd [#allocation3], %s18
      %s20 = smul.addr %s16, 128
      %s21 = scalar_lea.hbm %s0, %s20
      %s22 = sshll.u32 [#allocation2], 4
      %s23 = int_to_ptr.vmem [resolvable:$true] %s22
      %28 = dma.hbm_to_vmem [thread:$0]  %s21, 256, %s23, [#allocation3], 128, 128, 8
    $region5: #{tpu_custom_call.1} parent=1 // pred_fallthru
      _
    // Predicated region
    $region6: #{tpu_custom_call.1} parent=1 // pred_check
      _
    $region7: #{tpu_custom_call.1} parent=1 // pred_check_branch
      %30 = sbr.rel (0) target = $region9
    $region8: #{tpu_custom_call.1} parent=1 // pred_region
      %s31 = sadd.s32 0, 0
      %s32 = smul.u32 2, %s31
      %s34 = ssub.s32 256, 256
      %35 = vsyncadd [#allocation6], %s34
      %s36 = smul.addr %s32, 128
      %s37 = scalar_lea.hbm %s1, %s36
      %s38 = sshll.u32 [#allocation5], 4
      %s39 = int_to_ptr.vmem [resolvable:$true] %s38
      %44 = dma.hbm_to_vmem [thread:$0]  %s37, 256, %s39, [#allocation6], 128, 128, 8
    $region9: #{tpu_custom_call.1} parent=1 // pred_fallthru
      _
    // Predicated region
    $region10: #{tpu_custom_call.1} parent=1 // pred_check
      _
    $region11: #{tpu_custom_call.1} parent=1 // pred_check_branch
      %46 = sbr.rel (0) target = $region13
    $region12: #{tpu_custom_call.1} parent=1 // pred_region
      %47 = dma.done [#allocation3], 256
    $region13: #{tpu_custom_call.1} parent=1 // pred_fallthru
      _
    // Predicated region
    $region14: #{tpu_custom_call.1} parent=1 // pred_check
      _
    $region15: #{tpu_custom_call.1} parent=1 // pred_check_branch
      %49 = sbr.rel (0) target = $region17
    $region16: #{tpu_custom_call.1} parent=1 // pred_region
      %50 = dma.done [#allocation6], 256
    $region17: #{tpu_custom_call.1} parent=1 // pred_fallthru
      _
    %s51 = sadd.s32 0, 0
    %s52 = smul.u32 2, %s51
    %s53 = sadd.s32 0, 0
    %s54 = smul.u32 2, %s53
    %p55 = scmp.eq.s32.totalorder 0, 0
    // Predicated region
    $region18: #{tpu_custom_call.1} parent=1 // pred_check
      %p56 = pneg %p55
    $region19: #{tpu_custom_call.1} parent=1 // pred_check_branch
      %58 = sbr.rel (%p56) target = $region21
    $region20: #{tpu_custom_call.1} parent=1 // pred_region
      %59 = vst [vmem:[#allocation7] sm:$0xff] 0.0
      %60 = vst [vmem:[#allocation8] sm:$0xff] 0.0
    $region21: #{tpu_custom_call.1} parent=1 // pred_fallthru
      _
    %v61 = vld [vmem:[#allocation2] sm:$0xff]
    %v62 = vld [vmem:[#allocation2 + $0x8] sm:$0xff]
    %v63 = vld [vmem:[#allocation5] sm:$0xff]
    %v64 = vld [vmem:[#allocation5 + $0x8] sm:$0xff]
    %v65 = vlog2.pop %v61
    %v66 = vmul.f32 %v65, 0.6931472
    %v67 = vlog2.pop %v62
    %v68 = vmul.f32 %v67, 0.6931472
    %v69 = vlog2.pop %v63
    %v70 = vmul.f32 %v69, 0.6931472
    %v71 = vlog2.pop %v64
    %v72 = vmul.f32 %v71, 0.6931472
    %v73 = vsub.f32 %v66, %v70
    %v74 = vsub.f32 %v68, %v72
    %v75 = vld [vmem:[#allocation7] sm:$0xff]
    %v76 = vadd.f32 %v73, %v74
    %v77 = vadd.f32 %v75, %v76
    %78 = vst [vmem:[#allocation7] sm:$0xff] %v77
    %v79 = vld [vmem:[#allocation8] sm:$0xff]
    %v80 = vmul.f32 %v73, %v73
    %v81 = vmul.f32 %v74, %v74
    %v82 = vadd.f32 %v80, %v81
    %v83 = vadd.f32 %v79, %v82
    %84 = vst [vmem:[#allocation8] sm:$0xff] %v83
    // Predicated region
    $region22: #{tpu_custom_call.1} parent=1 // pred_check
      _
    $region23: #{tpu_custom_call.1} parent=1 // pred_check_branch
      %86 = sbr.rel (0) target = $region25
    $region24: #{tpu_custom_call.1} parent=1 // pred_region
      %s88 = ssub.s32 128, 128
      %89 = vsyncadd [#allocation4], %s88
      %s91 = sshll.u32 [#allocation7], 4
      %s92 = int_to_ptr.vmem [resolvable:$true] %s91
      %94 = dma.vmem_to_hbm [thread:$0]  %s92, 128, %s2, [#allocation4]
    $region25: #{tpu_custom_call.1} parent=1 // pred_fallthru
      _
    // Predicated region
    $region26: #{tpu_custom_call.1} parent=1 // pred_check
      _
    $region27: #{tpu_custom_call.1} parent=1 // pred_check_branch
      %96 = sbr.rel (0) target = $region29
    $region28: #{tpu_custom_call.1} parent=1 // pred_region
      %s98 = ssub.s32 128, 128
      %99 = vsyncadd [#allocation9], %s98
      %s101 = sshll.u32 [#allocation8], 4
      %s102 = int_to_ptr.vmem [resolvable:$true] %s101
      %104 = dma.vmem_to_hbm [thread:$0]  %s102, 128, %s3, [#allocation9]
    $region29: #{tpu_custom_call.1} parent=1 // pred_fallthru
      _
    // Predicated region
    $region30: #{tpu_custom_call.1} parent=1 // pred_check
      _
    $region31: #{tpu_custom_call.1} parent=1 // pred_check_branch
      %106 = sbr.rel (0) target = $region33
    $region32: #{tpu_custom_call.1} parent=1 // pred_region
      %107 = dma.done [#allocation4], 128
    $region33: #{tpu_custom_call.1} parent=1 // pred_fallthru
      _
    // Predicated region
    $region34: #{tpu_custom_call.1} parent=1 // pred_check
      _
    $region35: #{tpu_custom_call.1} parent=1 // pred_check_branch
      %109 = sbr.rel (0) target = $region37
    $region36: #{tpu_custom_call.1} parent=1 // pred_region
      %110 = dma.done [#allocation9], 128
    $region37: #{tpu_custom_call.1} parent=1 // pred_fallthru
      _
    %111 = vsyncpa [#allocation3], 1
    %112 = vsyncpa [#allocation6], 1
    %113 = vsyncpa [#allocation4], 1
    %114 = vsyncpa [#allocation9], 1

</llo_original>
